<compile_context>
chip_gen: v5e
topology: v5e:2x2
jax: 0.10.0
libtpu: 0.0.40
codegen_flags: <defaults>
</compile_context>

<pallas_src>
import math

import jax
import jax.numpy as jnp
from jax.experimental import pallas as pl
from jax.experimental.pallas import tpu as pltpu

LANE = 128
MIN_TM = 16            # bf16 sublane packing (16 sublanes / vreg)


def _round_up(x, m):
    return ((x + m - 1) // m) * m


def _vmem_caps():
    """Generation-aware (tiling budget, vmem_limit_bytes)."""
    try:
        cap = int(pltpu.get_tpu_info().vmem_capacity_bytes)
    except Exception:
        cap = None
    if not cap:
        cap = 64 << 20                      # conservative: v7x per-TensorCore
    limit = min(cap * 3 // 4, 100 << 20)    # v5e/v6e -> 96 MiB, v7x -> 48 MiB
    budget = limit * 3 // 4                 # headroom for compiler scratch
    return budget, limit


# --------------------------------------------------------------------------
# Kernels
# --------------------------------------------------------------------------
def mlp_resident_kernel(x_ref, w1_ref, b1_ref, w2_ref, b2_ref, out_ref):
    """Weights fully resident in VMEM; one batch tile per grid step."""
    x = x_ref[...].astype(w1_ref.dtype)                       # in-kernel cast
    a = jnp.dot(x, w1_ref[...], preferred_element_type=jnp.float32)
    a = jnp.maximum(a + b1_ref[...], 0.0)                     # bias+ReLU, f32
    y = jnp.dot(a.astype(w2_ref.dtype), w2_ref[...],
                preferred_element_type=jnp.float32)
    out_ref[...] = (y + b2_ref[...]).astype(out_ref.dtype)


def mlp_htiled_kernel(x_ref, w1_ref, b1_ref, w2_ref, b2_ref, out_ref):
    """Fallback for huge hidden dims: H-tiled reduction, accumulate directly
    into the resident f32 output block (no scratch accumulator)."""
    h = pl.program_id(1)

    @pl.when(h == 0)
    def _init():
        out_ref[...] = jnp.broadcast_to(b2_ref[...], out_ref.shape)

    x = x_ref[...].astype(w1_ref.dtype)
    a = jnp.dot(x, w1_ref[...], preferred_element_type=jnp.float32)
    a = jnp.maximum(a + b1_ref[...], 0.0)
    out_ref[...] += jnp.dot(a.astype(w2_ref.dtype), w2_ref[...],
                            preferred_element_type=jnp.float32)


# --------------------------------------------------------------------------
# One-time parameter preparation (outside the hot path).
# --------------------------------------------------------------------------
def prepare_params(w1, b1, w2, b2, compute_dtype=jnp.bfloat16):
    """w1: (H, D_in), b1: (H,), w2: (C, H), b2: (C,)  (PyTorch layout).

    Transposes to (in, out), zero-pads H and C to multiples of 128 (so the
    matmul N dims / output stores are lane-dense) and casts matmul operands
    to bf16.  D_in is left unpadded (handled via full-extent blocks).
    """
    hidden, d_in = w1.shape
    num_classes = w2.shape[0]
    h_pad = _round_up(hidden, LANE)
    c_pad = _round_up(num_classes, LANE)

    w1_p = jnp.zeros((d_in, h_pad), compute_dtype)
    w1_p = w1_p.at[:, :hidden].set(w1.T.astype(compute_dtype))
    w2_p = jnp.zeros((h_pad, c_pad), compute_dtype)
    w2_p = w2_p.at[:hidden, :num_classes].set(w2.T.astype(compute_dtype))
    b1_p = jnp.zeros((1, h_pad), jnp.float32).at[0, :hidden].set(
        b1.astype(jnp.float32))
    b2_p = jnp.zeros((1, c_pad), jnp.float32).at[0, :num_classes].set(
        b2.astype(jnp.float32))

    return dict(w1=w1_p, b1=b1_p, w2=w2_p, b2=b2_p,
                d_in=d_in, hidden=hidden, num_classes=num_classes)


# --------------------------------------------------------------------------
# Tile selection
# --------------------------------------------------------------------------
def _pick_hidden_tile(h_pad, max_th):
    """Largest th <= max_th dividing h_pad, preferring 256-multiples (MXU)."""
    for gran in (256, LANE):
        th = (min(max_th, h_pad) // gran) * gran
        while th >= gran and h_pad % th:
            th -= gran
        if th >= gran:
            return th
    return min(h_pad, LANE)


def _pick_batch_tile(n, per_row_bytes, fixed_bytes, budget, max_tm=1024):
    tm = min(max_tm, _round_up(max(n, 1), MIN_TM))
    while tm > MIN_TM and fixed_bytes + 2 * tm * per_row_bytes > budget:
        tm = max(MIN_TM, _round_up(tm // 2, MIN_TM))
    return tm


def _pick_htiled_tiles(n, d_in, h_pad, c_pad, x_isize, budget):
    tm = min(512, _round_up(max(n, 1), MIN_TM))
    th = _pick_hidden_tile(h_pad, 512)

    def est(tm, th):
        x_t = tm * d_in * x_isize
        w1_t = d_in * th * 2
        w2_t = th * c_pad * 2
        b_t = (th + c_pad) * 4
        out_t = tm * c_pad * 4
        return 2 * (x_t + w1_t + w2_t + b_t + out_t)

    while est(tm, th) > budget:
        if th > LANE:
            th = _pick_hidden_tile(h_pad, th - LANE)
        elif tm > MIN_TM:
            tm = max(MIN_TM, _round_up(tm // 2, MIN_TM))
        else:
            break
    return tm, th


# --------------------------------------------------------------------------
# Forward wrapper.
# --------------------------------------------------------------------------
def mlp_forward(x, params):
    """x: (N, ...) -> logits (N, num_classes)."""
    w1_p, b1_p = params["w1"], params["b1"]
    w2_p, b2_p = params["w2"], params["b2"]
    d_in, num_classes = params["d_in"], params["num_classes"]
    h_pad = w1_p.shape[1]
    c_pad = w2_p.shape[1]

    n = x.shape[0]
    x2d = x.reshape(n, -1)                       # torch: x.view(x.size(0), -1)
    assert x2d.shape[1] == d_in, "input feature size mismatch"

    out_dtype = jnp.bfloat16 if x2d.dtype == jnp.bfloat16 else jnp.float32
    x_isize = x2d.dtype.itemsize
    out_isize = jnp.dtype(out_dtype).itemsize

    budget, vmem_limit = _vmem_caps()
    weight_bytes = 2 * (w1_p.size * 2 + w2_p.size * 2      # x2: double buffers
                        + b1_p.size * 4 + b2_p.size * 4)
    per_row_bytes = d_in * x_isize + c_pad * out_isize
    use_resident = weight_bytes + 2 * MIN_TM * per_row_bytes <= budget

    if use_resident:
        # ---------------- Path A: weights resident, 1-D grid over batch ----
        tm = _pick_batch_tile(n, per_row_bytes, weight_bytes, budget)
        n_pad = _round_up(n, tm)
        x_in = x2d if n_pad == n else jnp.pad(x2d, ((0, n_pad - n), (0, 0)))
        grid = (n_pad // tm,)
        # TODO(synk): for v7x with a single batch tile, only one TensorCore is
        # engaged; splitting H across cores would need a second-stage add.
        out = pl.pallas_call(
            mlp_resident_kernel,
            out_shape=jax.ShapeDtypeStruct((n_pad, c_pad), out_dtype),
            grid=grid,
            in_specs=[
                pl.BlockSpec((tm, d_in),     lambda m: (m, 0)),   # x tile
                pl.BlockSpec((d_in, h_pad),  lambda m: (0, 0)),   # w1 resident
                pl.BlockSpec((1, h_pad),     lambda m: (0, 0)),   # b1 resident
                pl.BlockSpec((h_pad, c_pad), lambda m: (0, 0)),   # w2 resident
                pl.BlockSpec((1, c_pad),     lambda m: (0, 0)),   # b2 resident
            ],
            out_specs=pl.BlockSpec((tm, c_pad), lambda m: (m, 0)),
            compiler_params=pltpu.CompilerParams(
                dimension_semantics=("parallel",),
                vmem_limit_bytes=vmem_limit),
            cost_estimate=pl.CostEstimate(
                flops=2 * n_pad * (d_in * h_pad + h_pad * c_pad),
                transcendentals=0,
                bytes_accessed=(n_pad * d_in * x_isize
                                + w1_p.size * 2 + w2_p.size * 2
                                + b1_p.size * 4 + b2_p.size * 4
                                + n_pad * c_pad * out_isize)),
        )(x_in, w1_p, b1_p, w2_p, b2_p)
    else:
        # ---------------- Path B: H-tiled reduction into resident out ------
        tm, th = _pick_htiled_tiles(n, d_in, h_pad, c_pad, x_isize, budget)
        n_pad = _round_up(n, tm)
        x_in = x2d if n_pad == n else jnp.pad(x2d, ((0, n_pad - n), (0, 0)))
        grid = (n_pad // tm, h_pad // th)               # reduction axis last
        out = pl.pallas_call(
            mlp_htiled_kernel,
            out_shape=jax.ShapeDtypeStruct((n_pad, c_pad), jnp.float32),
            grid=grid,
            in_specs=[
                pl.BlockSpec((tm, d_in),   lambda m, h: (m, 0)),
                pl.BlockSpec((d_in, th),   lambda m, h: (0, h)),
                pl.BlockSpec((1, th),      lambda m, h: (0, h)),
                pl.BlockSpec((th, c_pad),  lambda m, h: (h, 0)),
                pl.BlockSpec((1, c_pad),   lambda m, h: (0, 0)),
            ],
            out_specs=pl.BlockSpec((tm, c_pad), lambda m, h: (m, 0)),
            compiler_params=pltpu.CompilerParams(
                dimension_semantics=("parallel", "arbitrary"),
                vmem_limit_bytes=vmem_limit),
        )(x_in, w1_p, b1_p, w2_p, b2_p)

    return out[:n, :num_classes].astype(out_dtype)


# --------------------------------------------------------------------------
# PyTorch-like init + self-test.
# --------------------------------------------------------------------------
def init_linear_params(key, out_features, in_features):
    """U(-1/sqrt(fan_in), 1/sqrt(fan_in)), like nn.Linear's default."""
    k_w, k_b = jax.random.split(key)
    bound = 1.0 / math.sqrt(in_features)
    w = jax.random.uniform(k_w, (out_features, in_features), jnp.float32,
                           -bound, bound)
    b = jax.random.uniform(k_b, (out_features,), jnp.float32, -bound, bound)
    return w, b


if __name__ == "__main__":
    # MLP(input_size=64, hidden_size=32, num_classes=10), batch of 8 8x8 inputs.
    batch = 8
    input_size = 64
    hidden_size = 32
    num_classes = 10

    key = jax.random.PRNGKey(0)
    k_x, k_fc1, k_fc2 = jax.random.split(key, 3)

    x = jax.random.normal(k_x, (batch, 8, 8), dtype=jnp.float32)  # 8*8 = D_in

    w1, b1 = init_linear_params(k_fc1, hidden_size, input_size)
    w2, b2 = init_linear_params(k_fc2, num_classes, hidden_size)

    params = prepare_params(w1, b1, w2, b2)       # one-time weight prep
    out = jax.block_until_ready(mlp_forward(x, params))

    # Pure-JAX f32 reference (same semantics as the torch module).
    x2d = x.reshape(batch, -1)
    ref = jnp.maximum(x2d @ w1.T + b1, 0.0) @ w2.T + b2

    assert out.shape == (batch, num_classes)
    # bf16 matmul operands with f32 accumulation -> loosened tolerance.
    assert jnp.allclose(out, ref, atol=3e-2, rtol=3e-2), (
        float(jnp.max(jnp.abs(out - ref))))

    print("KERNEL_OK")
</pallas_src>

<mosaic_0001>
module attributes {stable_mosaic.version = 11 : i64} {
  func.func @mlp_resident_kernel(%arg0: i32, %arg1: memref<16x64xf32, #tpu.memory_space<vmem>>, %arg2: memref<64x128xbf16, #tpu.memory_space<vmem>>, %arg3: memref<1x128xf32, #tpu.memory_space<vmem>>, %arg4: memref<128x128xbf16, #tpu.memory_space<vmem>>, %arg5: memref<1x128xf32, #tpu.memory_space<vmem>>, %arg6: memref<16x128xf32, #tpu.memory_space<vmem>>) attributes {dimension_semantics = [#tpu.dimension_semantics<parallel>], iteration_bounds = array<i64: 1>, scalar_prefetch = 0 : i64, scratch_operands = 0 : i64, tpu.core_type = #tpu.core_type<tc>, window_params = [{transform_indices = @transform_0, window_bounds = array<i64: 16, 64>}, {pipeline_mode = #tpu.pipeline_mode<synchronous>, transform_indices = @transform_1, window_bounds = array<i64: 64, 128>}, {pipeline_mode = #tpu.pipeline_mode<synchronous>, transform_indices = @transform_2, window_bounds = array<i64: 1, 128>}, {pipeline_mode = #tpu.pipeline_mode<synchronous>, transform_indices = @transform_3, window_bounds = array<i64: 128, 128>}, {pipeline_mode = #tpu.pipeline_mode<synchronous>, transform_indices = @transform_4, window_bounds = array<i64: 1, 128>}, {transform_indices = @transform_5, window_bounds = array<i64: 16, 128>}]} {
    %c0 = arith.constant 0 : index
    %c0_0 = arith.constant 0 : index
    %0 = vector.load %arg1[%c0, %c0_0] : memref<16x64xf32, #tpu.memory_space<vmem>>, vector<16x64xf32>
    %1 = arith.truncf %0 : vector<16x64xf32> to vector<16x64xbf16>
    %c0_1 = arith.constant 0 : index
    %c0_2 = arith.constant 0 : index
    %2 = vector.load %arg2[%c0_1, %c0_2] : memref<64x128xbf16, #tpu.memory_space<vmem>>, vector<64x128xbf16>
    %cst = arith.constant dense<0.000000e+00> : vector<16x128xf32>
    %3 = tpu.matmul %1, %2, %cst {dimension_numbers = #tpu.dot_dimension_numbers<[1], [0], [0], [1], [0, 0, 1, 1], [], []>} : vector<16x64xbf16>, vector<64x128xbf16>, vector<16x128xf32> -> vector<16x128xf32>
    %c0_3 = arith.constant 0 : index
    %c0_4 = arith.constant 0 : index
    %4 = vector.load %arg3[%c0_3, %c0_4] : memref<1x128xf32, #tpu.memory_space<vmem>>, vector<1x128xf32>
    %5 = vector.broadcast %4 : vector<1x128xf32> to vector<16x128xf32>
    %6 = arith.addf %3, %5 : vector<16x128xf32>
    %cst_5 = arith.constant 0.000000e+00 : f32
    %7 = vector.broadcast %cst_5 : f32 to vector<16x128xf32>
    %8 = arith.maximumf %6, %7 : vector<16x128xf32>
    %9 = arith.truncf %8 : vector<16x128xf32> to vector<16x128xbf16>
    %c0_6 = arith.constant 0 : index
    %c0_7 = arith.constant 0 : index
    %10 = vector.load %arg4[%c0_6, %c0_7] : memref<128x128xbf16, #tpu.memory_space<vmem>>, vector<128x128xbf16>
    %cst_8 = arith.constant dense<0.000000e+00> : vector<16x128xf32>
    %11 = tpu.matmul %9, %10, %cst_8 {dimension_numbers = #tpu.dot_dimension_numbers<[1], [0], [0], [1], [0, 0, 1, 1], [], []>} : vector<16x128xbf16>, vector<128x128xbf16>, vector<16x128xf32> -> vector<16x128xf32>
    %c0_9 = arith.constant 0 : index
    %c0_10 = arith.constant 0 : index
    %12 = vector.load %arg5[%c0_9, %c0_10] : memref<1x128xf32, #tpu.memory_space<vmem>>, vector<1x128xf32>
    %13 = vector.broadcast %12 : vector<1x128xf32> to vector<16x128xf32>
    %14 = arith.addf %11, %13 : vector<16x128xf32>
    %c0_11 = arith.constant 0 : index
    %c0_12 = arith.constant 0 : index
    %15 = vector.load %arg6[%c0_11, %c0_12] : memref<16x128xf32, #tpu.memory_space<vmem>>, vector<16x128xf32>
    tpu.vector_store %arg6[%c0_11, %c0_12], %14 {strides = array<i32>} : memref<16x128xf32, #tpu.memory_space<vmem>>, vector<16x128xf32>,
    return
  }
  func.func @transform_0(%arg0: i32) -> (i32, i32) {
    %c0_i32 = arith.constant 0 : i32
    %c0_i32_0 = arith.constant 0 : i32
    return %arg0, %c0_i32 : i32, i32
  }
  func.func @transform_1(%arg0: i32) -> (i32, i32) {
    %c0_i32 = arith.constant 0 : i32
    %c0_i32_0 = arith.constant 0 : i32
    %c0_i32_1 = arith.constant 0 : i32
    return %c0_i32, %c0_i32_0 : i32, i32
  }
  func.func @transform_2(%arg0: i32) -> (i32, i32) {
    %c0_i32 = arith.constant 0 : i32
    %c0_i32_0 = arith.constant 0 : i32
    %c0_i32_1 = arith.constant 0 : i32
    return %c0_i32, %c0_i32_0 : i32, i32
  }
  func.func @transform_3(%arg0: i32) -> (i32, i32) {
    %c0_i32 = arith.constant 0 : i32
    %c0_i32_0 = arith.constant 0 : i32
    %c0_i32_1 = arith.constant 0 : i32
    return %c0_i32, %c0_i32_0 : i32, i32
  }
  func.func @transform_4(%arg0: i32) -> (i32, i32) {
    %c0_i32 = arith.constant 0 : i32
    %c0_i32_0 = arith.constant 0 : i32
    %c0_i32_1 = arith.constant 0 : i32
    return %c0_i32, %c0_i32_0 : i32, i32
  }
  func.func @transform_5(%arg0: i32) -> (i32, i32) {
    %c0_i32 = arith.constant 0 : i32
    %c0_i32_0 = arith.constant 0 : i32
    return %arg0, %c0_i32 : i32, i32
  }
}

</mosaic_0001>

<llo_original>
// kernel: tpu_custom_call.1
$region0: #{tpu_custom_call.1}
  #allocation0 [shape = 'u32[]', space=smem, size = 0x4, offset = 0x4, fixed_abs, tag = 'smem constant byte address 0x4 - core index']
  #allocation1 [shape = 'u32[72,128]{1,0:T(1,128)}', space=vmem, size = 0x9000, scoped, tag = 'internal scratch']
  %s0 = inlined_call_operand.hbm [shape: f32[16,64], index: 0, kind: input, shape index: {}]
  %s1 = inlined_call_operand.hbm [shape: bf16[64,128], index: 1, kind: input, shape index: {}]
  %s2 = inlined_call_operand.vmem [shape: f32[1,128], index: 2, kind: input, shape index: {}]
  %s3 = inlined_call_operand.hbm [shape: bf16[128,128], index: 3, kind: input, shape index: {}]
  %s4 = inlined_call_operand.vmem [shape: f32[1,128], index: 4, kind: input, shape index: {}]
  %s5 = inlined_call_operand.hbm [shape: f32[16,128], index: 5, kind: output, shape index: {}]
  %s6 = sld [smem:[#allocation0]]
  $region42: #{tpu_custom_call.1} parent=0
    _
  %s8 = ssub.s32 1, %s6
  %s9 = scalar_select 0, %s8, %s6
  $region1: #{tpu_custom_call.1} parent=0
    #allocation2 [shape = 'u8[8192]{0}', space=vmem, size = 0x2000, scoped, tag = 'input window, operand 0, single buffered']
    #allocation3 [shape = 's32[1]{0}', space=sflag, size = 0x4, scoped, tag = 'scoped memory for tpu_custom_call.1']
    #allocation4 [shape = 's32[1]{0}', space=sflag, size = 0x4, scoped, tag = 'scoped memory for tpu_custom_call.1']
    #allocation5 [shape = 'u8[16384]{0}', space=vmem, size = 0x4000, scoped, tag = 'input window, operand 1, single buffered']
    #allocation6 [shape = 's32[1]{0}', space=sflag, size = 0x4, scoped, tag = 'scoped memory for tpu_custom_call.1']
    #allocation7 [shape = 'u8[32768]{0}', space=vmem, size = 0x8000, scoped, tag = 'input window, operand 3, single buffered']
    #allocation8 [shape = 'u8[8192]{0}', space=vmem, size = 0x2000, scoped, tag = 'output window, operand 0, single buffered']
    %10 = vsyncpa [#allocation3], 0
    %11 = vsyncpa [#allocation6], 0
    %12 = vsyncpa [#allocation4], 0
    // Predicated region
    $region2: #{tpu_custom_call.1} parent=1 // pred_check
      _
    $region3: #{tpu_custom_call.1} parent=1 // pred_check_branch
      %14 = sbr.rel (0) target = $region5
    $region4: #{tpu_custom_call.1} parent=1 // pred_region
      %16 = vsyncadd [#allocation3], 0
      %s17 = sshll.u32 %s0, 4
      %s18 = int_to_ptr.hbm [resolvable:$true] %s17
      %s19 = sshll.u32 [#allocation2], 4
      %s20 = int_to_ptr.vmem [resolvable:$true] %s19
      %25 = dma.hbm_to_vmem [thread:$0]  %s18, 256, %s20, [#allocation3], 128, 128, 8
    $region5: #{tpu_custom_call.1} parent=1 // pred_fallthru
      _
    // Predicated region
    $region6: #{tpu_custom_call.1} parent=1 // pred_check
      _
    $region7: #{tpu_custom_call.1} parent=1 // pred_check_branch
      %27 = sbr.rel (0) target = $region9
    $region8: #{tpu_custom_call.1} parent=1 // pred_region
      %29 = vsyncadd [#allocation6], 0
      %s30 = sshll.u32 %s1, 4
      %s31 = int_to_ptr.hbm [resolvable:$true] %s30
      %s32 = sshll.u32 [#allocation5], 4
      %s33 = int_to_ptr.vmem [resolvable:$true] %s32
      %38 = dma.hbm_to_vmem [thread:$0]  %s31, 512, %s33, [#allocation6], 64, 64, 4
    $region9: #{tpu_custom_call.1} parent=1 // pred_fallthru
      _
    // Predicated region
    $region10: #{tpu_custom_call.1} parent=1 // pred_check
      _
    $region11: #{tpu_custom_call.1} parent=1 // pred_check_branch
      %40 = sbr.rel (0) target = $region13
    $region12: #{tpu_custom_call.1} parent=1 // pred_region
      _
    $region13: #{tpu_custom_call.1} parent=1 // pred_fallthru
      _
    // Predicated region
    $region14: #{tpu_custom_call.1} parent=1 // pred_check
      _
    $region15: #{tpu_custom_call.1} parent=1 // pred_check_branch
      %42 = sbr.rel (0) target = $region17
    $region16: #{tpu_custom_call.1} parent=1 // pred_region
      %44 = vsyncadd [#allocation6], 0
      %s45 = sshll.u32 %s3, 4
      %s46 = int_to_ptr.hbm [resolvable:$true] %s45
      %s47 = sshll.u32 [#allocation7], 4
      %s48 = int_to_ptr.vmem [resolvable:$true] %s47
      %53 = dma.hbm_to_vmem [thread:$0]  %s46, 1024, %s48, [#allocation6], 64, 64, 4
    $region17: #{tpu_custom_call.1} parent=1 // pred_fallthru
      _
    // Predicated region
    $region18: #{tpu_custom_call.1} parent=1 // pred_check
      _
    $region19: #{tpu_custom_call.1} parent=1 // pred_check_branch
      %55 = sbr.rel (0) target = $region21
    $region20: #{tpu_custom_call.1} parent=1 // pred_region
      _
    $region21: #{tpu_custom_call.1} parent=1 // pred_fallthru
      _
    // Predicated region
    $region22: #{tpu_custom_call.1} parent=1 // pred_check
      _
    $region23: #{tpu_custom_call.1} parent=1 // pred_check_branch
      %57 = sbr.rel (0) target = $region25
    $region24: #{tpu_custom_call.1} parent=1 // pred_region
      %59 = dma.done [#allocation3], 256
    $region25: #{tpu_custom_call.1} parent=1 // pred_fallthru
      _
    // Predicated region
    $region26: #{tpu_custom_call.1} parent=1 // pred_check
      _
    $region27: #{tpu_custom_call.1} parent=1 // pred_check_branch
      %61 = sbr.rel (0) target = $region29
    $region28: #{tpu_custom_call.1} parent=1 // pred_region
      %63 = dma.done [#allocation6], 512
    $region29: #{tpu_custom_call.1} parent=1 // pred_fallthru
      _
    // Predicated region
    $region30: #{tpu_custom_call.1} parent=1 // pred_check
      _
    $region31: #{tpu_custom_call.1} parent=1 // pred_check_branch
      %65 = sbr.rel (0) target = $region33
    $region32: #{tpu_custom_call.1} parent=1 // pred_region
      %67 = dma.done [#allocation6], 1024
    $region33: #{tpu_custom_call.1} parent=1 // pred_fallthru
      _
    %v69 = vld [vmem:[#allocation2] sm:$0xff]
    %v70 = vld [vmem:[#allocation2 + $0x8] sm:$0xff]
    %v71 = vpack.c.bf16 %v70, %v69
    %v72 = vld [vmem:[#allocation5] sm:$0xf]
    %v73 = vld [vmem:[#allocation5 + $0x4] sm:$0xf]
    %v74 = vld [vmem:[#allocation5 + $0x8] sm:$0xf]
    %v75 = vld [vmem:[#allocation5 + $0xc] sm:$0xf]
    %v76 = vld [vmem:[#allocation5 + $0x10] sm:$0xf]
    %v77 = vld [vmem:[#allocation5 + $0x14] sm:$0xf]
    %v78 = vld [vmem:[#allocation5 + $0x18] sm:$0xf]
    %v79 = vld [vmem:[#allocation5 + $0x1c] sm:$0xf]
    %v80 = vld [vmem:[%s2] sm:$0x1]
    %v82 = vperm.slane %v80, 0
    %v92 = vunpack.c.l.b16 %v72
    %v93 = vunpack.c.l.b16 %v73
    %v94 = vunpack.c.l.b16 %v74
    %v95 = vunpack.c.l.b16 %v75
    %v96 = vunpack.c.l.b16 %v76
    %v97 = vunpack.c.l.b16 %v77
    %v98 = vunpack.c.l.b16 %v78
    %v99 = vunpack.c.l.b16 %v79
    %v100 = vpack.c.b16 %v93, %v92
    %v101 = vpack.c.b16 %v95, %v94
    %v102 = vpack.c.b16 %v97, %v96
    %v103 = vpack.c.b16 %v99, %v98
    %vm108 = vcmask 523264
    %v110 = vsel %vm108, %v71, 0
    %112 = vmatpush.bf16.msra.mxu0 0
    %113 = vmatpush.bf16.msra.mxu0 0
    %114 = vmatpush.bf16.msra.mxu0 0
    %115 = vmatpush.bf16.msra.mxu0 0
    %116 = vmatpush.bf16.msra.mxu0 %v103
    %117 = vmatpush.bf16.msra.mxu0 %v102
    %118 = vmatpush.bf16.msra.mxu0 %v101
    %119 = vmatpush.bf16.msra.mxu0 %v100
    %120 = vmatmul.bf16.gmra.mxu0 %v110
    %v121 = vpop.f32.mrf.mxu0
    %v122 = vadd.f32 %v82, %v121
    %v123 = vpop.f32.mrf.mxu0
    %v124 = vadd.f32 %v82, %v123
    %125 = vdwg.mxu0
    %v126 = vmax.f32 %v122, 0.0
    %v127 = vmax.f32 %v124, 0.0
    %v128 = vpack.c.bf16 %v127, %v126
    %v129 = vld [vmem:[#allocation7] sm:$0xf]
    %v130 = vld [vmem:[#allocation7 + $0x4] sm:$0xf]
    %v131 = vld [vmem:[#allocation7 + $0x8] sm:$0xf]
    %v132 = vld [vmem:[#allocation7 + $0xc] sm:$0xf]
    %v133 = vld [vmem:[#allocation7 + $0x10] sm:$0xf]
    %v134 = vld [vmem:[#allocation7 + $0x14] sm:$0xf]
    %v135 = vld [vmem:[#allocation7 + $0x18] sm:$0xf]
    %v136 = vld [vmem:[#allocation7 + $0x1c] sm:$0xf]
    %v137 = vld [vmem:[#allocation7 + $0x20] sm:$0xf]
    %v138 = vld [vmem:[#allocation7 + $0x24] sm:$0xf]
    %v139 = vld [vmem:[#allocation7 + $0x28] sm:$0xf]
    %v140 = vld [vmem:[#allocation7 + $0x2c] sm:$0xf]
    %v141 = vld [vmem:[#allocation7 + $0x30] sm:$0xf]
    %v142 = vld [vmem:[#allocation7 + $0x34] sm:$0xf]
    %v143 = vld [vmem:[#allocation7 + $0x38] sm:$0xf]
    %v144 = vld [vmem:[#allocation7 + $0x3c] sm:$0xf]
    %v145 = vld [vmem:[%s4] sm:$0x1]
    %v147 = vperm.slane %v145, 0
    %v165 = vunpack.c.l.b16 %v129
    %v166 = vunpack.c.l.b16 %v130
    %v167 = vunpack.c.l.b16 %v131
    %v168 = vunpack.c.l.b16 %v132
    %v169 = vunpack.c.l.b16 %v133
    %v170 = vunpack.c.l.b16 %v134
    %v171 = vunpack.c.l.b16 %v135
    %v172 = vunpack.c.l.b16 %v136
    %v173 = vunpack.c.l.b16 %v137
    %v174 = vunpack.c.l.b16 %v138
    %v175 = vunpack.c.l.b16 %v139
    %v176 = vunpack.c.l.b16 %v140
    %v177 = vunpack.c.l.b16 %v141
    %v178 = vunpack.c.l.b16 %v142
    %v179 = vunpack.c.l.b16 %v143
    %v180 = vunpack.c.l.b16 %v144
    %v181 = vpack.c.b16 %v166, %v165
    %v182 = vpack.c.b16 %v168, %v167
    %v183 = vpack.c.b16 %v170, %v169
    %v184 = vpack.c.b16 %v172, %v171
    %v185 = vpack.c.b16 %v174, %v173
    %v186 = vpack.c.b16 %v176, %v175
    %v187 = vpack.c.b16 %v178, %v177
    %v188 = vpack.c.b16 %v180, %v179
    %197 = vmatpush.bf16.msra.mxu0 %v188
    %198 = vmatpush.bf16.msra.mxu0 %v187
    %199 = vmatpush.bf16.msra.mxu0 %v186
    %200 = vmatpush.bf16.msra.mxu0 %v185
    %201 = vmatpush.bf16.msra.mxu0 %v184
    %202 = vmatpush.bf16.msra.mxu0 %v183
    %203 = vmatpush.bf16.msra.mxu0 %v182
    %204 = vmatpush.bf16.msra.mxu0 %v181
    %205 = vmatmul.bf16.gmra.mxu0 %v128
    %v206 = vpop.f32.mrf.mxu0
    %v207 = vadd.f32 %v147, %v206
    %v208 = vpop.f32.mrf.mxu0
    %v209 = vadd.f32 %v147, %v208
    %210 = vdwg.mxu0
    %211 = vst [vmem:[#allocation8] sm:$0xff] %v207
    %212 = vst [vmem:[#allocation8 + $0x8] sm:$0xff] %v209
    // Predicated region
    $region34: #{tpu_custom_call.1} parent=1 // pred_check
      _
    $region35: #{tpu_custom_call.1} parent=1 // pred_check_branch
      %214 = sbr.rel (0) target = $region37
    $region36: #{tpu_custom_call.1} parent=1 // pred_region
      %216 = vsyncadd [#allocation4], 0
      %s217 = sshll.u32 [#allocation8], 4
      %s218 = int_to_ptr.vmem [resolvable:$true] %s217
      %s219 = sshll.u32 %s5, 4
      %s220 = int_to_ptr.hbm [resolvable:$true] %s219
      %225 = dma.vmem_to_hbm [thread:$0]  %s218, 256, %s220, [#allocation4], 128, 128, 8
    $region37: #{tpu_custom_call.1} parent=1 // pred_fallthru
      _
    // Predicated region
    $region38: #{tpu_custom_call.1} parent=1 // pred_check
      _
    $region39: #{tpu_custom_call.1} parent=1 // pred_check_branch
      %227 = sbr.rel (0) target = $region41
    $region40: #{tpu_custom_call.1} parent=1 // pred_region
      %229 = dma.done [#allocation4], 256
    $region41: #{tpu_custom_call.1} parent=1 // pred_fallthru
      _
    %230 = vsyncpa [#allocation3], 1
    %231 = vsyncpa [#allocation6], 1
    %232 = vsyncpa [#allocation4], 1

</llo_original>
